<compile_context>
chip_gen: v5e
topology: v5e:2x2
jax: 0.10.0
libtpu: 0.0.40
codegen_flags: <defaults>
</compile_context>

<pallas_src>
import functools
import math

import jax
import jax.numpy as jnp
from jax.experimental import pallas as pl
from jax.experimental.pallas import tpu as pltpu

_LANE = 128          # lane tile along the box dimension
_TILE_R_MAX = 1024   # max sublane-rows per grid step (1024*128 boxes, ~4 MiB block)

_TAN_3PI_8 = 2.414213562373095   # tan(3*pi/8)
_TAN_PI_8 = 0.4142135623730951   # tan(pi/8)


def _atan_f32(x):
    """Single-precision arctan from VPU ops (Cephes atanf range reduction).

    Max abs error ~1e-7. Numerator/denominator are selected *before* a single
    divide (one EUP push per call instead of two); no branch ever divides by
    zero, so no inf/NaN appears even in discarded select branches.
    """
    ax = jnp.abs(x)
    big = ax > _TAN_3PI_8
    mid = ax > _TAN_PI_8
    num = jnp.where(big, -1.0, jnp.where(mid, ax - 1.0, ax))
    den = jnp.where(big, ax, jnp.where(mid, ax + 1.0, 1.0))
    xr = num / den
    off = jnp.where(big, 0.5 * math.pi, jnp.where(mid, 0.25 * math.pi, 0.0))
    z = xr * xr
    p = (((8.05374449538e-2 * z - 1.38776856032e-1) * z
          + 1.99777106478e-1) * z - 3.33329491539e-1)
    y = off + (p * z * xr + xr)
    return jnp.where(x < 0.0, -y, y)


def _iou_loss_kernel(box_ref, out_ref, *, loss_type, reduce_out):
    # box_ref block: (8, tile_r, 128); each component is a dense (tile_r, 128) tile.
    px = box_ref[0]
    py = box_ref[1]
    pw = box_ref[2]
    ph = box_ref[3]
    tx = box_ref[4]
    ty = box_ref[5]
    tw = box_ref[6]
    th = box_ref[7]

    # Half-extents / corners, reused by intersection and enclosing box.
    pw_h = pw * 0.5
    ph_h = ph * 0.5
    tw_h = tw * 0.5
    th_h = th * 0.5
    p_l = px - pw_h
    p_r = px + pw_h
    p_t = py - ph_h
    p_b = py + ph_h
    t_l = tx - tw_h
    t_r = tx + tw_h
    t_t = ty - th_h
    t_b = ty + th_h

    # Intersection box.
    tl_x = jnp.maximum(p_l, t_l)
    tl_y = jnp.maximum(p_t, t_t)
    br_x = jnp.minimum(p_r, t_r)
    br_y = jnp.minimum(p_b, t_b)

    area_p = pw * ph
    area_g = tw * th
    area_i = jnp.where((tl_x < br_x) & (tl_y < br_y),
                       (br_x - tl_x) * (br_y - tl_y), 0.0)
    area_u = area_p + area_g - area_i
    iou = area_i / (area_u + 1e-16)

    if loss_type == "iou":
        loss = 1.0 - iou ** 2
    else:
        # Enclosing (convex) box, shared by giou/diou/ciou/eiou.
        c_tl_x = jnp.minimum(p_l, t_l)
        c_tl_y = jnp.minimum(p_t, t_t)
        c_br_x = jnp.maximum(p_r, t_r)
        c_br_y = jnp.maximum(p_b, t_b)
        c_w = c_br_x - c_tl_x
        c_h = c_br_y - c_tl_y

        if loss_type == "giou":
            area_c = c_w * c_h
            giou = iou - (area_c - area_u) / jnp.maximum(area_c, 1e-16)
            loss = 1.0 - jnp.clip(giou, -1.0, 1.0) ** 2
        elif loss_type == "diou":
            # Bug-compatible with PyTorch: no epsilon on `c`.
            c = c_w ** 2 + c_h ** 2
            d = (px - tx) ** 2 + (py - ty) ** 2
            diou = iou - d / c
            loss = 1.0 - jnp.clip(diou, -1.0, 1.0) ** 2
        elif loss_type == "ciou":
            # If bundle dumps ever show vreg spills at large tile_r, chunk this
            # DAG over sublane groups with lax.fori_loop(unroll=True); not
            # applied here since no spills were observed.
            convex_dis = c_w ** 2 + c_h ** 2 + 1e-7
            center_dis = (px - tx) ** 2 + (py - ty) ** 2
            v = (4.0 / (math.pi ** 2)) * (
                _atan_f32(tw / jnp.maximum(th, 1e-7))
                - _atan_f32(pw / jnp.maximum(ph, 1e-7))) ** 2
            # torch.no_grad() only affects autodiff; forward value is identical.
            alpha = v / (1.0 + 1e-7 - iou + v)
            ciou = iou - (center_dis / convex_dis + alpha * v)
            loss = 1.0 - jnp.clip(ciou, -1.0, 1.0) ** 2
        elif loss_type == "eiou":
            convex_dis = c_w ** 2 + c_h ** 2 + 1e-7
            center_dis = (px - tx) ** 2 + (py - ty) ** 2
            dis_w = (pw - tw) ** 2
            dis_h = (ph - th) ** 2
            C_w = c_w ** 2 + 1e-7
            C_h = c_h ** 2 + 1e-7
            eiou = iou - center_dis / convex_dis - dis_w / C_w - dis_h / C_h
            loss = 1.0 - jnp.clip(eiou, -1.0, 1.0) ** 2
        else:
            raise ValueError(f"unknown loss_type: {loss_type}")

    if reduce_out:
        # Per-step partial sum, lane-dense (8, 128) block. Padded boxes are
        # identical unit boxes -> loss exactly 0.0 in f32, so no masking needed.
        tr = loss.shape[0]
        partial = loss.reshape(tr // 8, 8, _LANE).sum(axis=0)
        out_ref[...] = partial.reshape(1, 8, _LANE)
    else:
        out_ref[...] = loss


def _choose_tiling(n):
    """Pick (tile_r, padded_rows, grid_steps) for N boxes.

    Targets >=2 grid steps (both v7x TensorCores busy), blocks up to ~4 MiB,
    and padding bounded by ~grid*8 rows instead of a full tile.
    """
    r_raw = max(1, pl.cdiv(n, _LANE))                 # rows of 128 boxes
    g = max(2, pl.cdiv(r_raw, _TILE_R_MAX))
    g = g + (g % 2)                                    # even step count
    tile_r = max(8, min(_TILE_R_MAX, pl.cdiv(pl.cdiv(r_raw, g), 8) * 8))
    grid = pl.cdiv(r_raw, tile_r)
    r = grid * tile_r
    return tile_r, r, grid


def pack_boxes(pred, target):
    """Build the component-major (8, r, 128) input layout.

    Producers that call the loss several times per step (multiple loss types,
    multiple heads) should cache this result and call `iou_loss_packed`
    directly to skip the relayout pass.
    TODO(synk): emit this layout directly in the upstream box decoder.
    """
    pred = pred.reshape(-1, 4).astype(jnp.float32)
    target = target.reshape(-1, 4).astype(jnp.float32)
    n = pred.shape[0]
    _, r, _ = _choose_tiling(n)
    n_pad = r * _LANE
    # Pad with all-ones boxes (pred == target, w = h = 1): benign for every
    # loss type (loss exactly 0, no NaN/Inf, safe for the no-epsilon diou).
    boxes = jnp.concatenate([pred, target], axis=1)                 # (n, 8)
    boxes = jnp.pad(boxes, ((0, n_pad - n), (0, 0)), constant_values=1.0)
    return boxes.T.reshape(8, r, _LANE)                             # (8, r, 128)


def iou_loss_packed(boxes, n, reduction="none", loss_type="iou"):
    """Loss from an already component-major (8, r, 128) box array (see pack_boxes)."""
    tile_r, r, grid = _choose_tiling(n)
    assert boxes.shape == (8, r, _LANE), (boxes.shape, (8, r, _LANE))

    reduce_out = reduction in ("mean", "sum")
    kernel = functools.partial(
        _iou_loss_kernel, loss_type=loss_type, reduce_out=reduce_out)

    if reduce_out:
        out_shape = jax.ShapeDtypeStruct((grid, 8, _LANE), jnp.float32)
        out_spec = pl.BlockSpec((1, 8, _LANE), lambda i: (i, 0, 0))
    else:
        out_shape = jax.ShapeDtypeStruct((r, _LANE), jnp.float32)
        out_spec = pl.BlockSpec((tile_r, _LANE), lambda i: (i, 0))

    out = pl.pallas_call(
        kernel,
        out_shape=out_shape,
        grid_spec=pltpu.PrefetchScalarGridSpec(
            num_scalar_prefetch=0,
            grid=(grid,),
            in_specs=[pl.BlockSpec((8, tile_r, _LANE), lambda i: (0, i, 0))],
            out_specs=out_spec,
        ),
        compiler_params=pltpu.CompilerParams(
            # Elementwise + independent blocks: shard grid steps across TCs.
            dimension_semantics=("parallel",),
            # Let XLA fold the pack_boxes relayout into the kernel's input DMA
            # when it is the immediate producer (no-op otherwise).
            allow_input_fusion=[True],
        ),
    )(boxes)

    if reduce_out:
        total = out.sum()          # padded boxes contribute exactly 0.0
        return total / n if reduction == "mean" else total
    return out.reshape(-1)[:n]


def iou_loss(pred, target, reduction="none", loss_type="iou"):
    """JAX/Pallas equivalent of IOUloss(reduction, loss_type)(pred, target)."""
    assert pred.shape[0] == target.shape[0]
    pred = pred.reshape(-1, 4)
    target = target.reshape(-1, 4)
    n = pred.shape[0]
    boxes = pack_boxes(pred, target)
    return iou_loss_packed(boxes, n, reduction=reduction, loss_type=loss_type)


def _ref_iou_loss(pred, target, reduction="none", loss_type="iou"):
    """Pure-JAX reference mirroring the PyTorch forward (all loss types)."""
    pred = pred.reshape(-1, 4).astype(jnp.float32)
    target = target.reshape(-1, 4).astype(jnp.float32)
    tl = jnp.maximum(pred[:, :2] - pred[:, 2:] / 2, target[:, :2] - target[:, 2:] / 2)
    br = jnp.minimum(pred[:, :2] + pred[:, 2:] / 2, target[:, :2] + target[:, 2:] / 2)
    area_p = jnp.prod(pred[:, 2:], 1)
    area_g = jnp.prod(target[:, 2:], 1)
    en = jnp.prod((tl < br).astype(tl.dtype), axis=1)
    area_i = jnp.prod(br - tl, 1) * en
    area_u = area_p + area_g - area_i
    iou = area_i / (area_u + 1e-16)
    if loss_type == "iou":
        loss = 1 - iou ** 2
    else:
        c_tl = jnp.minimum(pred[:, :2] - pred[:, 2:] / 2, target[:, :2] - target[:, 2:] / 2)
        c_br = jnp.maximum(pred[:, :2] + pred[:, 2:] / 2, target[:, :2] + target[:, 2:] / 2)
        if loss_type == "giou":
            area_c = jnp.prod(c_br - c_tl, 1)
            giou = iou - (area_c - area_u) / jnp.maximum(area_c, 1e-16)
            loss = 1 - jnp.clip(giou, -1.0, 1.0) ** 2
        elif loss_type == "diou":
            w_c = (c_br - c_tl)[:, 0]
            h_c = (c_br - c_tl)[:, 1]
            c = w_c ** 2 + h_c ** 2
            w_d = (pred[:, :2] - target[:, :2])[:, 0]
            h_d = (pred[:, :2] - target[:, :2])[:, 1]
            d = w_d ** 2 + h_d ** 2
            diou = iou - d / c
            loss = 1 - jnp.clip(diou, -1.0, 1.0) ** 2
        elif loss_type == "ciou":
            convex_dis = (c_br[:, 0] - c_tl[:, 0]) ** 2 + (c_br[:, 1] - c_tl[:, 1]) ** 2 + 1e-7
            center_dis = (pred[:, 0] - target[:, 0]) ** 2 + (pred[:, 1] - target[:, 1]) ** 2
            v = (4.0 / math.pi ** 2) * (
                jnp.arctan(target[:, 2] / jnp.maximum(target[:, 3], 1e-7))
                - jnp.arctan(pred[:, 2] / jnp.maximum(pred[:, 3], 1e-7))) ** 2
            alpha = v / (1 + 1e-7 - iou + v)
            ciou = iou - (center_dis / convex_dis + alpha * v)
            loss = 1 - jnp.clip(ciou, -1.0, 1.0) ** 2
        elif loss_type == "eiou":
            convex_dis = (c_br[:, 0] - c_tl[:, 0]) ** 2 + (c_br[:, 1] - c_tl[:, 1]) ** 2 + 1e-7
            center_dis = (pred[:, 0] - target[:, 0]) ** 2 + (pred[:, 1] - target[:, 1]) ** 2
            dis_w = (pred[:, 2] - target[:, 2]) ** 2
            dis_h = (pred[:, 3] - target[:, 3]) ** 2
            C_w = (c_br[:, 0] - c_tl[:, 0]) ** 2 + 1e-7
            C_h = (c_br[:, 1] - c_tl[:, 1]) ** 2 + 1e-7
            eiou = iou - center_dis / convex_dis - dis_w / C_w - dis_h / C_h
            loss = 1 - jnp.clip(eiou, -1.0, 1.0) ** 2
        else:
            raise ValueError(loss_type)
    if reduction == "mean":
        loss = loss.mean()
    elif reduction == "sum":
        loss = loss.sum()
    return loss


def _make_boxes(key, n):
    k1, k2 = jax.random.split(key)
    return jnp.concatenate(
        [jax.random.uniform(k1, (n, 2), minval=0.0, maxval=10.0),
         jax.random.uniform(k2, (n, 2), minval=0.5, maxval=4.0)], axis=1)


if __name__ == "__main__":
    key = jax.random.PRNGKey(0)

    # n=8 / n=300: single grid step; n=3000: multi-step grid (2 "parallel"
    # blocks) with row padding, exercising the v7x two-TC path.
    for n in (8, 300, 3000):
        kp, kt, key = jax.random.split(key, 3)
        pred = _make_boxes(kp, n)
        target = _make_boxes(kt, n)

        # All loss types, reduction='none'.
        for lt in ("iou", "giou", "diou", "ciou", "eiou"):
            out = jax.block_until_ready(iou_loss(pred, target, "none", lt))
            ref = _ref_iou_loss(pred, target, "none", lt)
            assert out.shape == (n,), (n, lt, out.shape)
            assert jnp.allclose(out, ref, atol=1e-5), (n, lt)

        # Reductions (exercise the partial-sum output path).
        for red in ("mean", "sum"):
            for lt in ("giou", "ciou"):
                out = jax.block_until_ready(iou_loss(pred, target, red, lt))
                ref = _ref_iou_loss(pred, target, red, lt)
                assert jnp.allclose(out, ref, rtol=1e-4, atol=1e-4), (n, red, lt)

    print("KERNEL_OK")
</pallas_src>

<mosaic_0001>
module attributes {stable_mosaic.version = 11 : i64} {
  func.func @_iou_loss_kernel(%arg0: i32, %arg1: memref<8x8x128xf32, #tpu.memory_space<vmem>>, %arg2: memref<8x128xf32, #tpu.memory_space<vmem>>) attributes {dimension_semantics = [#tpu.dimension_semantics<parallel>], iteration_bounds = array<i64: 1>, scalar_prefetch = 0 : i64, scratch_operands = 0 : i64, tpu.core_type = #tpu.core_type<tc>, window_params = [{transform_indices = @transform_0, window_bounds = array<i64: 8, 8, 128>}, {transform_indices = @transform_1, window_bounds = array<i64: 8, 128>}]} {
    %c0 = arith.constant 0 : index
    %c0_0 = arith.constant 0 : index
    %c0_1 = arith.constant 0 : index
    %0 = vector.load %arg1[%c0, %c0_0, %c0_1] : memref<8x8x128xf32, #tpu.memory_space<vmem>>, vector<1x8x128xf32>
    %1 = vector.shape_cast %0 : vector<1x8x128xf32> to vector<8x128xf32>
    %c1 = arith.constant 1 : index
    %c0_2 = arith.constant 0 : index
    %c0_3 = arith.constant 0 : index
    %2 = vector.load %arg1[%c1, %c0_2, %c0_3] : memref<8x8x128xf32, #tpu.memory_space<vmem>>, vector<1x8x128xf32>
    %3 = vector.shape_cast %2 : vector<1x8x128xf32> to vector<8x128xf32>
    %c2 = arith.constant 2 : index
    %c0_4 = arith.constant 0 : index
    %c0_5 = arith.constant 0 : index
    %4 = vector.load %arg1[%c2, %c0_4, %c0_5] : memref<8x8x128xf32, #tpu.memory_space<vmem>>, vector<1x8x128xf32>
    %5 = vector.shape_cast %4 : vector<1x8x128xf32> to vector<8x128xf32>
    %c3 = arith.constant 3 : index
    %c0_6 = arith.constant 0 : index
    %c0_7 = arith.constant 0 : index
    %6 = vector.load %arg1[%c3, %c0_6, %c0_7] : memref<8x8x128xf32, #tpu.memory_space<vmem>>, vector<1x8x128xf32>
    %7 = vector.shape_cast %6 : vector<1x8x128xf32> to vector<8x128xf32>
    %c4 = arith.constant 4 : index
    %c0_8 = arith.constant 0 : index
    %c0_9 = arith.constant 0 : index
    %8 = vector.load %arg1[%c4, %c0_8, %c0_9] : memref<8x8x128xf32, #tpu.memory_space<vmem>>, vector<1x8x128xf32>
    %9 = vector.shape_cast %8 : vector<1x8x128xf32> to vector<8x128xf32>
    %c5 = arith.constant 5 : index
    %c0_10 = arith.constant 0 : index
    %c0_11 = arith.constant 0 : index
    %10 = vector.load %arg1[%c5, %c0_10, %c0_11] : memref<8x8x128xf32, #tpu.memory_space<vmem>>, vector<1x8x128xf32>
    %11 = vector.shape_cast %10 : vector<1x8x128xf32> to vector<8x128xf32>
    %c6 = arith.constant 6 : index
    %c0_12 = arith.constant 0 : index
    %c0_13 = arith.constant 0 : index
    %12 = vector.load %arg1[%c6, %c0_12, %c0_13] : memref<8x8x128xf32, #tpu.memory_space<vmem>>, vector<1x8x128xf32>
    %13 = vector.shape_cast %12 : vector<1x8x128xf32> to vector<8x128xf32>
    %c7 = arith.constant 7 : index
    %c0_14 = arith.constant 0 : index
    %c0_15 = arith.constant 0 : index
    %14 = vector.load %arg1[%c7, %c0_14, %c0_15] : memref<8x8x128xf32, #tpu.memory_space<vmem>>, vector<1x8x128xf32>
    %15 = vector.shape_cast %14 : vector<1x8x128xf32> to vector<8x128xf32>
    %cst = arith.constant 5.000000e-01 : f32
    %16 = vector.broadcast %cst : f32 to vector<8x128xf32>
    %17 = arith.mulf %5, %16 : vector<8x128xf32>
    %cst_16 = arith.constant 5.000000e-01 : f32
    %18 = vector.broadcast %cst_16 : f32 to vector<8x128xf32>
    %19 = arith.mulf %7, %18 : vector<8x128xf32>
    %cst_17 = arith.constant 5.000000e-01 : f32
    %20 = vector.broadcast %cst_17 : f32 to vector<8x128xf32>
    %21 = arith.mulf %13, %20 : vector<8x128xf32>
    %cst_18 = arith.constant 5.000000e-01 : f32
    %22 = vector.broadcast %cst_18 : f32 to vector<8x128xf32>
    %23 = arith.mulf %15, %22 : vector<8x128xf32>
    %24 = arith.subf %1, %17 : vector<8x128xf32>
    %25 = arith.addf %1, %17 : vector<8x128xf32>
    %26 = arith.subf %3, %19 : vector<8x128xf32>
    %27 = arith.addf %3, %19 : vector<8x128xf32>
    %28 = arith.subf %9, %21 : vector<8x128xf32>
    %29 = arith.addf %9, %21 : vector<8x128xf32>
    %30 = arith.subf %11, %23 : vector<8x128xf32>
    %31 = arith.addf %11, %23 : vector<8x128xf32>
    %32 = arith.maximumf %24, %28 : vector<8x128xf32>
    %33 = arith.maximumf %26, %30 : vector<8x128xf32>
    %34 = arith.minimumf %25, %29 : vector<8x128xf32>
    %35 = arith.minimumf %27, %31 : vector<8x128xf32>
    %36 = arith.mulf %5, %7 : vector<8x128xf32>
    %37 = arith.mulf %13, %15 : vector<8x128xf32>
    %38 = arith.cmpf olt, %32, %34 : vector<8x128xf32>
    %39 = arith.cmpf olt, %33, %35 : vector<8x128xf32>
    %40 = arith.andi %38, %39 : vector<8x128xi1>
    %41 = arith.subf %34, %32 : vector<8x128xf32>
    %42 = arith.subf %35, %33 : vector<8x128xf32>
    %43 = arith.mulf %41, %42 : vector<8x128xf32>
    %cst_19 = arith.constant 0.000000e+00 : f32
    %44 = vector.broadcast %cst_19 : f32 to vector<8x128xf32>
    %45 = arith.select %40, %43, %44 : vector<8x128xi1>, vector<8x128xf32>
    %46 = arith.addf %36, %37 : vector<8x128xf32>
    %47 = arith.subf %46, %45 : vector<8x128xf32>
    %cst_20 = arith.constant 1.000000e-16 : f32
    %48 = vector.broadcast %cst_20 : f32 to vector<8x128xf32>
    %49 = arith.addf %47, %48 : vector<8x128xf32>
    %50 = arith.divf %45, %49 : vector<8x128xf32>
    %51 = arith.mulf %50, %50 : vector<8x128xf32>
    %cst_21 = arith.constant 1.000000e+00 : f32
    %52 = vector.broadcast %cst_21 : f32 to vector<8x128xf32>
    %53 = arith.subf %52, %51 : vector<8x128xf32>
    %c0_22 = arith.constant 0 : index
    %c0_23 = arith.constant 0 : index
    %54 = vector.load %arg2[%c0_22, %c0_23] : memref<8x128xf32, #tpu.memory_space<vmem>>, vector<8x128xf32>
    tpu.vector_store %arg2[%c0_22, %c0_23], %53 {strides = array<i32>} : memref<8x128xf32, #tpu.memory_space<vmem>>, vector<8x128xf32>,
    return
  }
  func.func @transform_0(%arg0: i32) -> (i32, i32, i32) {
    %c0_i32 = arith.constant 0 : i32
    %c0_i32_0 = arith.constant 0 : i32
    %c0_i32_1 = arith.constant 0 : i32
    return %c0_i32, %arg0, %c0_i32_0 : i32, i32, i32
  }
  func.func @transform_1(%arg0: i32) -> (i32, i32) {
    %c0_i32 = arith.constant 0 : i32
    %c0_i32_0 = arith.constant 0 : i32
    return %arg0, %c0_i32 : i32, i32
  }
}

</mosaic_0001>

<llo_original>
// kernel: tpu_custom_call.1
$region0: #{tpu_custom_call.1}
  #allocation0 [shape = 'u32[]', space=smem, size = 0x4, offset = 0x4, fixed_abs, tag = 'smem constant byte address 0x4 - core index']
  #allocation1 [shape = 'u32[72,128]{1,0:T(1,128)}', space=vmem, size = 0x9000, scoped, tag = 'internal scratch']
  %s0 = inlined_call_operand.hbm [shape: f32[8,8,128], index: 0, kind: input, shape index: {}]
  %s1 = inlined_call_operand.hbm [shape: f32[8,128], index: 1, kind: output, shape index: {}]
  %s2 = sld [smem:[#allocation0]]
  $region18: #{tpu_custom_call.1} parent=0
    _
  %s4 = ssub.s32 1, %s2
  %s5 = scalar_select 0, %s4, %s2
  $region1: #{tpu_custom_call.1} parent=0
    #allocation2 [shape = 'u8[32768]{0}', space=vmem, size = 0x8000, scoped, tag = 'input window, operand 0, single buffered']
    #allocation3 [shape = 's32[1]{0}', space=sflag, size = 0x4, scoped, tag = 'scoped memory for tpu_custom_call.1']
    #allocation4 [shape = 's32[1]{0}', space=sflag, size = 0x4, scoped, tag = 'scoped memory for tpu_custom_call.1']
    #allocation5 [shape = 'u8[4096]{0}', space=vmem, size = 0x1000, scoped, tag = 'output window, operand 0, single buffered']
    %6 = vsyncpa [#allocation3], 0
    %7 = vsyncpa [#allocation4], 0
    // Predicated region
    $region2: #{tpu_custom_call.1} parent=1 // pred_check
      _
    $region3: #{tpu_custom_call.1} parent=1 // pred_check_branch
      %9 = sbr.rel (0) target = $region5
    $region4: #{tpu_custom_call.1} parent=1 // pred_region
      %11 = vsyncadd [#allocation3], 0
      %s12 = sshll.u32 %s0, 4
      %s13 = int_to_ptr.hbm [resolvable:$true] %s12
      %s14 = sshll.u32 [#allocation2], 4
      %s15 = int_to_ptr.vmem [resolvable:$true] %s14
      %20 = dma.hbm_to_vmem [thread:$0]  %s13, 1024, %s15, [#allocation3], 128, 128, 8
    $region5: #{tpu_custom_call.1} parent=1 // pred_fallthru
      _
    // Predicated region
    $region6: #{tpu_custom_call.1} parent=1 // pred_check
      _
    $region7: #{tpu_custom_call.1} parent=1 // pred_check_branch
      %22 = sbr.rel (0) target = $region9
    $region8: #{tpu_custom_call.1} parent=1 // pred_region
      %24 = dma.done [#allocation3], 1024
    $region9: #{tpu_custom_call.1} parent=1 // pred_fallthru
      _
    %v25 = vld [vmem:[#allocation2] sm:$0xff]
    %s26 = scalar_lea.vmem [#allocation2], 8
    %v27 = vld [vmem:[%s26] sm:$0xff]
    %s28 = scalar_lea.vmem [#allocation2], 16
    %v29 = vld [vmem:[%s28] sm:$0xff]
    %s30 = scalar_lea.vmem [#allocation2], 24
    %v31 = vld [vmem:[%s30] sm:$0xff]
    %s32 = scalar_lea.vmem [#allocation2], 32
    %v33 = vld [vmem:[%s32] sm:$0xff]
    %s34 = scalar_lea.vmem [#allocation2], 40
    %v35 = vld [vmem:[%s34] sm:$0xff]
    %s36 = scalar_lea.vmem [#allocation2], 48
    %v37 = vld [vmem:[%s36] sm:$0xff]
    %s38 = scalar_lea.vmem [#allocation2], 56
    %v39 = vld [vmem:[%s38] sm:$0xff]
    %v40 = vmul.f32 %v29, 0.5
    %v41 = vmul.f32 %v31, 0.5
    %v42 = vmul.f32 %v37, 0.5
    %v43 = vmul.f32 %v39, 0.5
    %v44 = vsub.f32 %v25, %v40
    %v45 = vadd.f32 %v25, %v40
    %v46 = vsub.f32 %v27, %v41
    %v47 = vadd.f32 %v27, %v41
    %v48 = vsub.f32 %v33, %v42
    %v49 = vadd.f32 %v33, %v42
    %v50 = vsub.f32 %v35, %v43
    %v51 = vadd.f32 %v35, %v43
    %v52 = vmax.f32 %v44, %v48
    %v53 = vmax.f32 %v46, %v50
    %v54 = vmin.f32 %v45, %v49
    %v55 = vmin.f32 %v47, %v51
    %v56 = vmul.f32 %v29, %v31
    %v57 = vmul.f32 %v37, %v39
    %vm58 = vcmp.lt.f32.partialorder %v52, %v54
    %vm59 = vcmp.lt.f32.partialorder %v53, %v55
    %vm60 = vmand %vm58, %vm59
    %v61 = vsub.f32 %v54, %v52
    %v62 = vsub.f32 %v55, %v53
    %v63 = vmul.f32 %v61, %v62
    %v64 = vsel %vm60, %v63, 0.0
    %v65 = vadd.f32 %v56, %v57
    %v66 = vsub.f32 %v65, %v64
    %v67 = vadd.f32 %v66, 1e-16
    %v68 = vrcp.pop %v67
    %v69 = vmul.f32 %v67, %v68
    %v70 = vsub.f32 1.0, %v69
    %v71 = vmul.f32 %v68, %v70
    %v72 = vadd.f32 %v68, %v71
    %vm73 = vweird.f32 %v67
    %vm74 = vweird.f32 %v68
    %vm75 = vmor %vm73, %vm74
    %v76 = vsel %vm75, %v68, %v72
    %v77 = vand.u32 2147483647, %v67
    %vm78 = vcmp.eq.f32.partialorder %v77, 8.507059e+37
    %v79 = vand.u32 %v67, 2147483648
    %v80 = vor.u32 1.1754944e-38, %v79
    %v81 = vsel %vm78, %v80, %v76
    %v82 = vmul.f32 %v64, %v81
    %v83 = vmul.f32 %v82, %v82
    %v84 = vsub.f32 1.0, %v83
    %85 = vst [vmem:[#allocation5] sm:$0xff] %v84
    // Predicated region
    $region10: #{tpu_custom_call.1} parent=1 // pred_check
      _
    $region11: #{tpu_custom_call.1} parent=1 // pred_check_branch
      %87 = sbr.rel (0) target = $region13
    $region12: #{tpu_custom_call.1} parent=1 // pred_region
      %89 = vsyncadd [#allocation4], 0
      %s91 = sshll.u32 [#allocation5], 4
      %s92 = int_to_ptr.vmem [resolvable:$true] %s91
      %s93 = sshll.u32 %s1, 4
      %s94 = int_to_ptr.hbm [resolvable:$true] %s93
      %96 = dma.vmem_to_hbm [thread:$0]  %s92, 128, %s94, [#allocation4]
    $region13: #{tpu_custom_call.1} parent=1 // pred_fallthru
      _
    // Predicated region
    $region14: #{tpu_custom_call.1} parent=1 // pred_check
      _
    $region15: #{tpu_custom_call.1} parent=1 // pred_check_branch
      %98 = sbr.rel (0) target = $region17
    $region16: #{tpu_custom_call.1} parent=1 // pred_region
      %100 = dma.done [#allocation4], 128
    $region17: #{tpu_custom_call.1} parent=1 // pred_fallthru
      _
    %101 = vsyncpa [#allocation3], 1
    %102 = vsyncpa [#allocation4], 1

</llo_original>
